<compile_context>
chip_gen: v5e
topology: v5e:2x2
jax: 0.10.0
libtpu: 0.0.40
codegen_flags: <defaults>
</compile_context>

<pallas_src>
import functools

import jax
import jax.numpy as jnp
from jax import lax
from jax.experimental import pallas as pl
from jax.experimental.pallas import tpu as pltpu


def _se_kernel(x_ref, w1f_ref, bn_shift_ref, w2_ref, o_ref, *,
               hw_chunk, n_chunks, unroll, use_mxu):
    # x_ref:        (1, C, HWp)  one full image per grid step (HWp % 128 == 0)
    # w1f_ref:      (C, Cmid)    w1.T * bn_scale / HW  (BN scale + 1/HW folded in)
    # bn_shift_ref: (1, Cmid)    folded eval-mode BatchNorm shift
    # w2_ref:       (C, Cmid)    second 1x1 conv weight
    c = x_ref.shape[1]

    # ---- Pass 1: chunked global-sum pool over the lane (spatial) axis. -------
    # Accumulate lane-wide chunks when the accumulator stays within ~16 vregs,
    # otherwise reduce each chunk to (C, 1) immediately (XLU slot is free here).
    if c * hw_chunk * 4 <= 64 * 1024:
        def pool_body(i, acc):
            off = pl.multiple_of(i * hw_chunk, 128)
            return acc + x_ref[0, :, pl.ds(off, hw_chunk)].astype(jnp.float32)

        acc = lax.fori_loop(0, n_chunks, pool_body,
                            jnp.zeros((c, hw_chunk), jnp.float32), unroll=unroll)
        pooled = jnp.sum(acc, axis=-1, keepdims=True)                 # (C, 1)
    else:
        def pool_body(i, acc):
            off = pl.multiple_of(i * hw_chunk, 128)
            xc = x_ref[0, :, pl.ds(off, hw_chunk)].astype(jnp.float32)
            return acc + jnp.sum(xc, axis=-1, keepdims=True)

        pooled = lax.fori_loop(0, n_chunks, pool_body,
                               jnp.zeros((c, 1), jnp.float32), unroll=unroll)

    # ---- Excite: FC1 (scale/1-over-HW pre-folded) + shift, ReLU, FC2, gate. --
    if use_mxu:
        h = jnp.dot(pooled.T, w1f_ref[...], preferred_element_type=jnp.float32)
        h = jnp.maximum(h + bn_shift_ref[...], 0.0)                   # (1, Cmid)
        a = jnp.dot(w2_ref[...], h.T, preferred_element_type=jnp.float32)  # (C, 1)
    else:
        h = jnp.sum(w1f_ref[...] * pooled, axis=0, keepdims=True)     # (1, Cmid)
        h = jnp.maximum(h + bn_shift_ref[...], 0.0)
        a = jnp.sum(w2_ref[...] * h, axis=-1, keepdims=True)          # (C, 1)

    a = jnp.clip(a + 3.0, 0.0, 6.0) * (1.0 / 6.0)                     # hard-sigmoid
    a_g = a.astype(o_ref.dtype)   # gate in the tensor dtype (bf16 stays bf16 on v6e/v7x)

    # ---- Pass 2: chunked gate + lane-dense store (bounded vreg live ranges). -
    @pl.loop(0, n_chunks, unroll=unroll)
    def _(i):
        off = pl.multiple_of(i * hw_chunk, 128)
        xc = x_ref[0, :, pl.ds(off, hw_chunk)]
        o_ref[0, :, pl.ds(off, hw_chunk)] = (xc * a_g).astype(o_ref.dtype)


def se_layer(x, w1, w2, bn_gamma, bn_beta, bn_mean, bn_var, eps=1e-5):
    """SELayer forward (eval mode) on NCHW input via a Pallas TPU kernel.

    x:  (N, C, H, W)
    w1: (C//4, C)   -- Conv2d(C, C//4, 1, bias=False).weight squeezed
    w2: (C, C//4)   -- Conv2d(C//4, C, 1, bias=False).weight squeezed
    bn_*: (C//4,)   -- BatchNorm2d(C//4) gamma/beta/running_mean/running_var
    """
    n, c, h, w = x.shape
    cmid = w1.shape[0]
    hw = h * w

    # Lane-dense spatial axis: flatten HW and pad up to a multiple of 128 so
    # every load/store of the big tensor is an unmasked, contiguous transfer.
    hw_p = ((hw + 127) // 128) * 128
    x2 = x.reshape(n, c, hw)
    if hw_p != hw:
        x2 = jnp.pad(x2, ((0, 0), (0, 0), (0, hw_p - hw)))  # zeros don't perturb the sum-pool

    # Fold eval-mode BatchNorm scale and the 1/HW pooling factor into the first
    # FC weight; only the BN shift survives as a bias (identical forward math).
    inv_std = 1.0 / jnp.sqrt(bn_var.astype(jnp.float32) + eps)
    bn_scale = bn_gamma.astype(jnp.float32) * inv_std                       # (Cmid,)
    bn_shift = (bn_beta.astype(jnp.float32)
                - bn_mean.astype(jnp.float32) * bn_scale).reshape(1, cmid)  # (1, Cmid)
    w1f = (jnp.transpose(w1).astype(jnp.float32) * bn_scale[None, :]) / hw  # (C, Cmid)
    w2f = w2.astype(jnp.float32)                                            # (C, Cmid)

    # Spatial chunk size for the in-kernel two-pass (multiple of 128, divides HWp).
    hw_chunk = 128
    for cand in (2048, 1024, 512, 256, 128):
        if hw_p % cand == 0:
            hw_chunk = cand
            break
    n_chunks = hw_p // hw_chunk
    unroll = n_chunks <= 8

    # Tiny FCs stay on VPU/XLU; large channel counts use the otherwise-idle MXU.
    use_mxu = (c >= 256) and (cmid >= 64)

    kernel = functools.partial(_se_kernel, hw_chunk=hw_chunk, n_chunks=n_chunks,
                               unroll=unroll, use_mxu=use_mxu)

    itemsize = x.dtype.itemsize
    cost = pl.CostEstimate(
        flops=4 * n * c * hw_p + 4 * n * c * cmid + 8 * n * cmid,
        transcendentals=0,
        bytes_accessed=2 * n * c * hw_p * itemsize + (2 * c * cmid + cmid) * 4,
    )

    # Deeper buffering of the big tensor only pays once there are enough grid
    # steps to pipeline across; keep default double-buffering for tiny batches.
    pipe = dict(pipeline_mode=pl.Buffered(3)) if n >= 4 else {}

    out2 = pl.pallas_call(
        kernel,
        out_shape=jax.ShapeDtypeStruct((n, c, hw_p), x.dtype),
        grid_spec=pltpu.PrefetchScalarGridSpec(
            num_scalar_prefetch=0,
            grid=(n,),
            in_specs=[
                pl.BlockSpec((1, c, hw_p), lambda i: (i, 0, 0), **pipe),  # x (lane-dense)
                pl.BlockSpec((c, cmid), lambda i: (0, 0)),                # folded w1
                pl.BlockSpec((1, cmid), lambda i: (0, 0)),                # bn shift
                pl.BlockSpec((c, cmid), lambda i: (0, 0)),                # w2
            ],
            out_specs=pl.BlockSpec((1, c, hw_p), lambda i: (i, 0, 0), **pipe),
        ),
        compiler_params=pltpu.CompilerParams(
            dimension_semantics=("parallel",),  # N >= 2 shards across v7x's two TCs
            vmem_limit_bytes=48 << 20,          # fits v7x's 64 MiB; raises v5e/v6e defaults
        ),
        cost_estimate=cost,
    )(x2, w1f, bn_shift, w2f)

    if hw_p != hw:
        out2 = out2[:, :, :hw]
    return out2.reshape(n, c, h, w)


if __name__ == "__main__":
    key = jax.random.PRNGKey(0)
    N, C, H, W = 2, 16, 16, 16
    Cmid = C // 4

    k_x, k_w1, k_w2, k_g, k_b, k_m, k_v = jax.random.split(key, 7)
    x = jax.random.normal(k_x, (N, C, H, W), dtype=jnp.float32)
    w1 = jax.random.normal(k_w1, (Cmid, C), dtype=jnp.float32) * 0.3
    w2 = jax.random.normal(k_w2, (C, Cmid), dtype=jnp.float32) * 0.3
    bn_gamma = jax.random.uniform(k_g, (Cmid,), minval=0.5, maxval=1.5, dtype=jnp.float32)
    bn_beta = jax.random.normal(k_b, (Cmid,), dtype=jnp.float32) * 0.1
    bn_mean = jax.random.normal(k_m, (Cmid,), dtype=jnp.float32) * 0.1
    bn_var = jax.random.uniform(k_v, (Cmid,), minval=0.5, maxval=1.5, dtype=jnp.float32)

    out = se_layer(x, w1, w2, bn_gamma, bn_beta, bn_mean, bn_var)
    out = jax.block_until_ready(out)

    # Pure-JAX reference (eval-mode SELayer forward).
    eps = 1e-5
    pooled = x.mean(axis=(2, 3))                                   # (N, C)
    href = pooled @ w1.T                                           # (N, Cmid)
    href = (href - bn_mean) / jnp.sqrt(bn_var + eps) * bn_gamma + bn_beta
    href = jnp.maximum(href, 0.0)
    aref = href @ w2.T                                             # (N, C)
    aref = jnp.clip(aref + 3.0, 0.0, 6.0) / 6.0
    ref = x * aref[:, :, None, None]

    assert out.shape == x.shape
    assert jnp.allclose(out, ref, rtol=1e-5, atol=1e-5), "Pallas SELayer mismatch vs reference"
    print("KERNEL_OK")
</pallas_src>

<mosaic_0001>
module attributes {stable_mosaic.version = 11 : i64} {
  func.func @_se_kernel(%arg0: i32, %arg1: memref<1x16x256xf32, #tpu.memory_space<vmem>>, %arg2: memref<16x4xf32, #tpu.memory_space<vmem>>, %arg3: memref<1x4xf32, #tpu.memory_space<vmem>>, %arg4: memref<16x4xf32, #tpu.memory_space<vmem>>, %arg5: memref<1x16x256xf32, #tpu.memory_space<vmem>>) attributes {dimension_semantics = [#tpu.dimension_semantics<parallel>], iteration_bounds = array<i64: 2>, scalar_prefetch = 0 : i64, scratch_operands = 0 : i64, tpu.core_type = #tpu.core_type<tc>, window_params = [{transform_indices = @transform_0, window_bounds = array<i64: 1, 16, 256>}, {pipeline_mode = #tpu.pipeline_mode<synchronous>, transform_indices = @transform_1, window_bounds = array<i64: 16, 4>}, {pipeline_mode = #tpu.pipeline_mode<synchronous>, transform_indices = @transform_2, window_bounds = array<i64: 1, 4>}, {pipeline_mode = #tpu.pipeline_mode<synchronous>, transform_indices = @transform_3, window_bounds = array<i64: 16, 4>}, {transform_indices = @transform_4, window_bounds = array<i64: 1, 16, 256>}]} {
    %cst = arith.constant 0.000000e+00 : f32
    %0 = vector.broadcast %cst : f32 to vector<16x256xf32>
    %c0_i32 = arith.constant 0 : i32
    %c256_i32 = arith.constant 256 : i32
    %1 = arith.muli %c0_i32, %c256_i32 : i32
    %2 = tpu.assume_multiple %1, 128 : i32
    %c0 = arith.constant 0 : index
    %c0_0 = arith.constant 0 : index
    %3 = arith.index_cast %2 : i32 to index
    %4 = vector.load %arg1[%c0, %c0_0, %3] : memref<1x16x256xf32, #tpu.memory_space<vmem>>, vector<1x16x256xf32>
    %5 = vector.shape_cast %4 : vector<1x16x256xf32> to vector<16x256xf32>
    %6 = arith.addf %0, %5 : vector<16x256xf32>
    %c1_i32 = arith.constant 1 : i32
    %cst_1 = arith.constant dense<0.000000e+00> : vector<16xf32>
    %7 = vector.multi_reduction <add>, %6, %cst_1 [1] : vector<16x256xf32> to vector<16xf32>
    %8 = vector.shape_cast %7 : vector<16xf32> to vector<16x1xf32>
    %c0_2 = arith.constant 0 : index
    %c0_3 = arith.constant 0 : index
    %9 = vector.load %arg2[%c0_2, %c0_3] : memref<16x4xf32, #tpu.memory_space<vmem>>, vector<16x4xf32>
    %10 = vector.broadcast %8 : vector<16x1xf32> to vector<16x4xf32>
    %11 = arith.mulf %9, %10 : vector<16x4xf32>
    %cst_4 = arith.constant dense<0.000000e+00> : vector<4xf32>
    %12 = vector.multi_reduction <add>, %11, %cst_4 [0] : vector<16x4xf32> to vector<4xf32>
    %13 = vector.shape_cast %12 : vector<4xf32> to vector<1x4xf32>
    %c0_5 = arith.constant 0 : index
    %c0_6 = arith.constant 0 : index
    %14 = vector.load %arg3[%c0_5, %c0_6] : memref<1x4xf32, #tpu.memory_space<vmem>>, vector<1x4xf32>
    %15 = arith.addf %13, %14 : vector<1x4xf32>
    %cst_7 = arith.constant 0.000000e+00 : f32
    %16 = vector.broadcast %cst_7 : f32 to vector<1x4xf32>
    %17 = arith.maximumf %15, %16 : vector<1x4xf32>
    %c0_8 = arith.constant 0 : index
    %c0_9 = arith.constant 0 : index
    %18 = vector.load %arg4[%c0_8, %c0_9] : memref<16x4xf32, #tpu.memory_space<vmem>>, vector<16x4xf32>
    %19 = vector.broadcast %17 : vector<1x4xf32> to vector<16x4xf32>
    %20 = arith.mulf %18, %19 : vector<16x4xf32>
    %cst_10 = arith.constant dense<0.000000e+00> : vector<16xf32>
    %21 = vector.multi_reduction <add>, %20, %cst_10 [1] : vector<16x4xf32> to vector<16xf32>
    %22 = vector.shape_cast %21 : vector<16xf32> to vector<16x1xf32>
    %cst_11 = arith.constant 3.000000e+00 : f32
    %23 = vector.broadcast %cst_11 : f32 to vector<16x1xf32>
    %24 = arith.addf %22, %23 : vector<16x1xf32>
    %cst_12 = arith.constant 0.000000e+00 : f32
    %cst_13 = arith.constant 6.000000e+00 : f32
    %25 = vector.broadcast %cst_12 : f32 to vector<16x1xf32>
    %26 = arith.maximumf %25, %24 : vector<16x1xf32>
    %27 = vector.broadcast %cst_13 : f32 to vector<16x1xf32>
    %28 = arith.minimumf %27, %26 : vector<16x1xf32>
    %cst_14 = arith.constant 0.166666672 : f32
    %29 = vector.broadcast %cst_14 : f32 to vector<16x1xf32>
    %30 = arith.mulf %28, %29 : vector<16x1xf32>
    %c0_i32_15 = arith.constant 0 : i32
    %c1_i32_16 = arith.constant 1 : i32
    %31 = arith.muli %c0_i32_15, %c1_i32_16 : i32
    %c0_i32_17 = arith.constant 0 : i32
    %32 = arith.addi %c0_i32_17, %31 : i32
    %c256_i32_18 = arith.constant 256 : i32
    %33 = arith.muli %32, %c256_i32_18 : i32
    %34 = tpu.assume_multiple %33, 128 : i32
    %c0_19 = arith.constant 0 : index
    %c0_20 = arith.constant 0 : index
    %35 = arith.index_cast %34 : i32 to index
    %36 = vector.load %arg1[%c0_19, %c0_20, %35] : memref<1x16x256xf32, #tpu.memory_space<vmem>>, vector<1x16x256xf32>
    %37 = vector.shape_cast %36 : vector<1x16x256xf32> to vector<16x256xf32>
    %38 = vector.broadcast %30 : vector<16x1xf32> to vector<16x256xf32>
    %39 = arith.mulf %37, %38 : vector<16x256xf32>
    %c0_21 = arith.constant 0 : index
    %c0_22 = arith.constant 0 : index
    %40 = arith.index_cast %34 : i32 to index
    %41 = vector.load %arg5[%c0_21, %c0_22, %40] : memref<1x16x256xf32, #tpu.memory_space<vmem>>, vector<1x16x256xf32>
    %42 = vector.shape_cast %41 : vector<1x16x256xf32> to vector<16x256xf32>
    %43 = vector.shape_cast %39 : vector<16x256xf32> to vector<1x16x256xf32>
    tpu.vector_store %arg5[%c0_21, %c0_22, %40], %43 {strides = array<i32>} : memref<1x16x256xf32, #tpu.memory_space<vmem>>, vector<1x16x256xf32>,
    %c1_i32_23 = arith.constant 1 : i32
    return
  }
  func.func @transform_0(%arg0: i32) -> (i32, i32, i32) {
    %c0_i32 = arith.constant 0 : i32
    %c0_i32_0 = arith.constant 0 : i32
    %c0_i32_1 = arith.constant 0 : i32
    return %arg0, %c0_i32, %c0_i32_0 : i32, i32, i32
  }
  func.func @transform_1(%arg0: i32) -> (i32, i32) {
    %c0_i32 = arith.constant 0 : i32
    %c0_i32_0 = arith.constant 0 : i32
    %c0_i32_1 = arith.constant 0 : i32
    return %c0_i32, %c0_i32_0 : i32, i32
  }
  func.func @transform_2(%arg0: i32) -> (i32, i32) {
    %c0_i32 = arith.constant 0 : i32
    %c0_i32_0 = arith.constant 0 : i32
    %c0_i32_1 = arith.constant 0 : i32
    return %c0_i32, %c0_i32_0 : i32, i32
  }
  func.func @transform_3(%arg0: i32) -> (i32, i32) {
    %c0_i32 = arith.constant 0 : i32
    %c0_i32_0 = arith.constant 0 : i32
    %c0_i32_1 = arith.constant 0 : i32
    return %c0_i32, %c0_i32_0 : i32, i32
  }
  func.func @transform_4(%arg0: i32) -> (i32, i32, i32) {
    %c0_i32 = arith.constant 0 : i32
    %c0_i32_0 = arith.constant 0 : i32
    %c0_i32_1 = arith.constant 0 : i32
    return %arg0, %c0_i32, %c0_i32_0 : i32, i32, i32
  }
}

</mosaic_0001>

<llo_original>
// kernel: tpu_custom_call.1
$region0: #{tpu_custom_call.1}
  #allocation0 [shape = 'u32[]', space=smem, size = 0x4, offset = 0x4, fixed_abs, tag = 'smem constant byte address 0x4 - core index']
  #allocation1 [shape = 'u32[72,128]{1,0:T(1,128)}', space=vmem, size = 0x9000, scoped, tag = 'internal scratch']
  %s0 = inlined_call_operand.hbm [shape: f32[2,16,256], index: 0, kind: input, shape index: {}]
  %s1 = inlined_call_operand.vmem [shape: f32[16,4], index: 1, kind: input, shape index: {}]
  %s2 = inlined_call_operand.vmem [shape: f32[1,4], index: 2, kind: input, shape index: {}]
  %s3 = inlined_call_operand.vmem [shape: f32[16,4], index: 3, kind: input, shape index: {}]
  %s4 = inlined_call_operand.hbm [shape: f32[2,16,256], index: 4, kind: output, shape index: {}]
  %s5 = sld [smem:[#allocation0]]
  $region53: #{tpu_custom_call.1} parent=0
    _
  %s7 = ssub.s32 1, %s5
  %s8 = scalar_select 0, %s7, %s5
  $region1: #{tpu_custom_call.1} parent=0
    #allocation2 [shape = 'u8[32768]{0}', space=vmem, size = 0x8000, scoped, tag = 'input window, operand 0']
    #allocation3 [shape = 's32[2]{0}', space=sflag, size = 0x8, scoped, tag = 'scoped memory for tpu_custom_call.1']
    #allocation4 [shape = 's32[2]{0}', space=sflag, size = 0x8, scoped, tag = 'scoped memory for tpu_custom_call.1']
    #allocation5 [shape = 'u8[32768]{0}', space=vmem, size = 0x8000, scoped, tag = 'output window, operand 0']
    %9 = vsyncpa [#allocation3], 0
    %s10 = scalar_lea.sflag [#allocation3], 1
    %11 = vsyncpa %s10, 0
    %12 = vsyncpa [#allocation4], 0
    %s13 = scalar_lea.sflag [#allocation4], 1
    %14 = vsyncpa %s13, 0
    loop: start=0, step=1, limit=4
    $region2: #{tpu_custom_call.1} parent=1 // loop_pre_header
      _
    $region3: #{tpu_custom_call.1} parent=1 // loop_header
      %s16 = sphi 0, %s20
      %p17 = scmp.ge.s32.totalorder %s16, 4
      %s26 = sphi 0, %s28
      %s29 = sphi 0, %s26
      %s30 = sphi 0, %s29
      %s46 = sphi 0, %s30
      %s50 = sphi 0, %s50
      %s52 = sphi 0, %s50
      %s53 = sphi 0, %s52
      %s67 = sphi 0, %s53
      %s71 = sphi 0, %s71
      %s73 = sphi 0, %s71
      %s74 = sphi 0, %s73
      %s88 = sphi 0, %s74
      %s92 = sphi 0, %s92
      %s94 = sphi 0, %s92
      %s95 = sphi 0, %s94
      %s109 = sphi 0, %s95
      %s115 = sphi 0, %s117
      %s118 = sphi 0, %s115
      %s119 = sphi 0, %s118
      %s135 = sphi 0, %s119
    $region4: #{tpu_custom_call.1} parent=1 // loop_header_branch
      %19 = sbr.rel (%p17) target = $region8
    $region5: #{tpu_custom_call.1} parent=1 // loop_body
      %s21 = ssub.s32 %s16, 1
      %s22 = ssub.s32 %s16, 2
      %s23 = sadd.s32 %s16, 1
      %s24 = ssub.s32 %s16, %s23
      %p25 = scmp.eq.s32.totalorder %s24, 0
      %s27 = sadd.s32 %s26, 1
      %s28 = scalar_select %p25, %s26, %s27
      %p31 = pneg %p25
      %p32 = scmp.eq.s32.totalorder %s16, 1
      %p33 = por %p31, %p32
      %p34 = scmp.ne.s32.totalorder %s26, %s29
      %p35 = scmp.eq.s32.totalorder %s16, 0
      %p36 = por %p34, %p35
      %p37 = scmp.ne.s32.totalorder %s26, %s29
      %p38 = scmp.eq.s32.totalorder %s21, 1
      %p39 = por %p37, %p38
      %p40 = scmp.ne.s32.totalorder %s29, %s30
      %p41 = scmp.eq.s32.totalorder %s21, 0
      %p42 = por %p40, %p41
      %p43 = scmp.ne.s32.totalorder %s29, %s30
      %p44 = scmp.eq.s32.totalorder %s22, 1
      %p45 = por %p43, %p44
      %p47 = scmp.ne.s32.totalorder %s30, %s46
      %p48 = scmp.eq.s32.totalorder %s22, 0
      %p49 = por %p47, %p48
      %s51 = sadd.s32 %s50, 1
      %p54 = scmp.eq.s32.totalorder %s16, 1
      %p55 = scmp.ne.s32.totalorder %s50, %s52
      %p56 = scmp.eq.s32.totalorder %s16, 0
      %p57 = por %p55, %p56
      %p58 = scmp.ne.s32.totalorder %s50, %s52
      %p59 = scmp.eq.s32.totalorder %s21, 1
      %p60 = por %p58, %p59
      %p61 = scmp.ne.s32.totalorder %s52, %s53
      %p62 = scmp.eq.s32.totalorder %s21, 0
      %p63 = por %p61, %p62
      %p64 = scmp.ne.s32.totalorder %s52, %s53
      %p65 = scmp.eq.s32.totalorder %s22, 1
      %p66 = por %p64, %p65
      %p68 = scmp.ne.s32.totalorder %s53, %s67
      %p69 = scmp.eq.s32.totalorder %s22, 0
      %p70 = por %p68, %p69
      %s72 = sadd.s32 %s71, 1
      %p75 = scmp.eq.s32.totalorder %s16, 1
      %p76 = scmp.ne.s32.totalorder %s71, %s73
      %p77 = scmp.eq.s32.totalorder %s16, 0
      %p78 = por %p76, %p77
      %p79 = scmp.ne.s32.totalorder %s71, %s73
      %p80 = scmp.eq.s32.totalorder %s21, 1
      %p81 = por %p79, %p80
      %p82 = scmp.ne.s32.totalorder %s73, %s74
      %p83 = scmp.eq.s32.totalorder %s21, 0
      %p84 = por %p82, %p83
      %p85 = scmp.ne.s32.totalorder %s73, %s74
      %p86 = scmp.eq.s32.totalorder %s22, 1
      %p87 = por %p85, %p86
      %p89 = scmp.ne.s32.totalorder %s74, %s88
      %p90 = scmp.eq.s32.totalorder %s22, 0
      %p91 = por %p89, %p90
      %s93 = sadd.s32 %s92, 1
      %p96 = scmp.eq.s32.totalorder %s16, 1
      %p97 = scmp.ne.s32.totalorder %s92, %s94
      %p98 = scmp.eq.s32.totalorder %s16, 0
      %p99 = por %p97, %p98
      %p100 = scmp.ne.s32.totalorder %s92, %s94
      %p101 = scmp.eq.s32.totalorder %s21, 1
      %p102 = por %p100, %p101
      %p103 = scmp.ne.s32.totalorder %s94, %s95
      %p104 = scmp.eq.s32.totalorder %s21, 0
      %p105 = por %p103, %p104
      %p106 = scmp.ne.s32.totalorder %s94, %s95
      %p107 = scmp.eq.s32.totalorder %s22, 1
      %p108 = por %p106, %p107
      %p110 = scmp.ne.s32.totalorder %s95, %s109
      %p111 = scmp.eq.s32.totalorder %s22, 0
      %p112 = por %p110, %p111
      %s113 = ssub.s32 %s16, %s23
      %p114 = scmp.eq.s32.totalorder %s113, 0
      %s116 = sadd.s32 %s115, 1
      %s117 = scalar_select %p114, %s115, %s116
      %p120 = pneg %p114
      %p121 = scmp.eq.s32.totalorder %s16, 1
      %p122 = por %p120, %p121
      %p123 = scmp.ne.s32.totalorder %s115, %s118
      %p124 = scmp.eq.s32.totalorder %s16, 0
      %p125 = por %p123, %p124
      %p126 = scmp.ne.s32.totalorder %s115, %s118
      %p127 = scmp.eq.s32.totalorder %s21, 1
      %p128 = por %p126, %p127
      %p129 = scmp.ne.s32.totalorder %s118, %s119
      %p130 = scmp.eq.s32.totalorder %s21, 0
      %p131 = por %p129, %p130
      %p132 = scmp.ne.s32.totalorder %s118, %s119
      %p133 = scmp.eq.s32.totalorder %s22, 1
      %p134 = por %p132, %p133
      %p136 = scmp.ne.s32.totalorder %s119, %s135
      %p137 = scmp.eq.s32.totalorder %s22, 0
      %p138 = por %p136, %p137
      %p139 = scmp.le.s32.totalorder 1, %s16
      %p140 = scmp.lt.s32.totalorder %s16, 3
      %p141 = pnand %p139, %p140
      %p142 = pneg %p141
      // Predicated region
      $region9: #{tpu_custom_call.1} parent=5 // pred_check
        _
      $region10: #{tpu_custom_call.1} parent=5 // pred_check_branch
        %144 = sbr.rel (%p141) target = $region12
      $region11: #{tpu_custom_call.1} parent=5 // pred_region
        %s145 = ssub.s32 %s16, 1
        // Predicated region
        $region13: #{tpu_custom_call.1} parent=11 // pred_check
          %p146 = pneg %p63
        $region14: #{tpu_custom_call.1} parent=11 // pred_check_branch
          %148 = sbr.rel (%p146) target = $region16
        $region15: #{tpu_custom_call.1} parent=11 // pred_region
          _
        $region16: #{tpu_custom_call.1} parent=11 // pred_fallthru
          _
        // Predicated region
        $region17: #{tpu_custom_call.1} parent=11 // pred_check
          %p149 = pneg %p84
        $region18: #{tpu_custom_call.1} parent=11 // pred_check_branch
          %151 = sbr.rel (%p149) target = $region20
        $region19: #{tpu_custom_call.1} parent=11 // pred_region
          _
        $region20: #{tpu_custom_call.1} parent=11 // pred_fallthru
          _
        // Predicated region
        $region21: #{tpu_custom_call.1} parent=11 // pred_check
          %p152 = pneg %p105
        $region22: #{tpu_custom_call.1} parent=11 // pred_check_branch
          %154 = sbr.rel (%p152) target = $region24
        $region23: #{tpu_custom_call.1} parent=11 // pred_region
          _
        $region24: #{tpu_custom_call.1} parent=11 // pred_fallthru
          _
      $region12: #{tpu_custom_call.1} parent=5 // pred_fallthru
        _
      %p155 = scmp.lt.s32.totalorder %s16, 2
      // Predicated region
      $region25: #{tpu_custom_call.1} parent=5 // pred_check
        %p156 = pneg %p155
      $region26: #{tpu_custom_call.1} parent=5 // pred_check_branch
        %158 = sbr.rel (%p156) target = $region28
      $region27: #{tpu_custom_call.1} parent=5 // pred_region
        // Predicated region
        $region29: #{tpu_custom_call.1} parent=27 // pred_check
          %p159 = pneg %p36
        $region30: #{tpu_custom_call.1} parent=27 // pred_check_branch
          %161 = sbr.rel (%p159) target = $region32
        $region31: #{tpu_custom_call.1} parent=27 // pred_region
          %s162 = sand.u32 %s26, 1
          %s163 = scalar_lea.sflag [#allocation3], %s162
          %s164 = sand.u32 %s26, 1
          %s165 = smul.addr %s164, 32
          %s166 = scalar_lea.vmem [#allocation2], %s165
          %168 = vsyncadd %s163, 0
          %s169 = smul.addr %s16, 4
          %s170 = smul.addr %s169, 8
          %s171 = scalar_lea.hbm %s0, %s170
          %s172 = sshll.u32 %s171, 4
          %s173 = int_to_ptr.hbm [resolvable:$true] %s172
          %s174 = sshll.u32 %s166, 4
          %s175 = int_to_ptr.vmem [resolvable:$true] %s174
          %180 = dma.hbm_to_vmem [thread:$0]  %s173, 512, %s175, %s163, 256, 256, 16
        $region32: #{tpu_custom_call.1} parent=27 // pred_fallthru
          _
      $region28: #{tpu_custom_call.1} parent=5 // pred_fallthru
        _
      %p181 = scmp.le.s32.totalorder 1, %s16
      %p182 = scmp.lt.s32.totalorder %s16, 3
      %p183 = pnand %p181, %p182
      %p184 = pneg %p183
      // Predicated region
      $region33: #{tpu_custom_call.1} parent=5 // pred_check
        _
      $region34: #{tpu_custom_call.1} parent=5 // pred_check_branch
        %186 = sbr.rel (%p183) target = $region36
      $region35: #{tpu_custom_call.1} parent=5 // pred_region
        %s187 = ssub.s32 %s16, 1
        %s188 = sand.u32 %s29, 1
        %s189 = scalar_lea.sflag [#allocation3], %s188
        %s190 = sand.u32 %s29, 1
        %s191 = smul.addr %s190, 32
        %s192 = scalar_lea.vmem [#allocation2], %s191
        // Predicated region
        $region37: #{tpu_custom_call.1} parent=35 // pred_check
          %p193 = pneg %p42
        $region38: #{tpu_custom_call.1} parent=35 // pred_check_branch
          %195 = sbr.rel (%p193) target = $region40
        $region39: #{tpu_custom_call.1} parent=35 // pred_region
          %197 = dma.done %s189, 512
        $region40: #{tpu_custom_call.1} parent=35 // pred_fallthru
          _
        %s198 = sand.u32 %s29, 1
        %s199 = scalar_lea.sflag [#allocation3], %s198
        %s200 = sand.u32 %s29, 1
        %s201 = smul.addr %s200, 32
        %s202 = scalar_lea.vmem [#allocation2], %s201
        %p203 = pneg %p42
        %p204 = pneg %p39
        %p205 = pneg %p63
        %p206 = pneg %p60
        %p207 = pneg %p84
        %p208 = pneg %p81
        %p209 = pneg %p105
        %p210 = pneg %p102
        %p211 = pneg %p131
        %p212 = pneg %p128
        %s213 = sand.u32 %s118, 1
        %s214 = scalar_lea.sflag [#allocation4], %s213
        %s215 = sand.u32 %s118, 1
        %s216 = smul.addr %s215, 32
        %s217 = scalar_lea.vmem [#allocation5], %s216
        %v218 = vld [vmem:[%s192] sm:$0xff]
        %v219 = vld [vmem:[%s192 + $0x8] sm:$0xff]
        %v220 = vld [vmem:[%s192 + $0x10] sm:$0xff]
        %v221 = vld [vmem:[%s192 + $0x18] sm:$0xff]
        %v222 = vadd.f32 %v218, 0.0
        %v223 = vadd.f32 %v219, 0.0
        %v224 = vadd.f32 %v220, 0.0
        %v225 = vadd.f32 %v221, 0.0
        %v226 = vadd.f32 %v222, %v223
        %227 = vadd.xlane.f32.xlu0 %v226
        %v228 = vpop.xlane.xlu0 %227
        %v229 = vadd.f32 %v224, %v225
        %230 = vadd.xlane.f32.xlu0 %v229
        %v231 = vpop.xlane.xlu0 %230
        %v232 = vld [vmem:[%s1] sm:$0xff]
        %v233 = vld [vmem:[%s1 + $0x8] sm:$0xff]
        %v234 = vmul.f32 %v232, %v228
        %v235 = vmul.f32 %v233, %v231
        %vm236 = vcmask 31744
        %v237 = vsel %vm236, %v234, 0.0
        %v238 = vsel %vm236, %v235, 0.0
        %v239 = vadd.f32 %v237, %v238
        %v240 = vrot.slane %v239, 4
        %v241 = vadd.f32 %v239, %v240
        %v242 = vrot.slane %v241, 2
        %v243 = vadd.f32 %v241, %v242
        %v244 = vrot.slane %v243, 1
        %v245 = vadd.f32 %v243, %v244
        %v246 = vld [vmem:[%s2] sm:$0x1]
        %v247 = vadd.f32 %v245, %v246
        %v248 = vmax.f32 %v247, 0.0
        %v249 = vld [vmem:[%s3] sm:$0xff]
        %v250 = vld [vmem:[%s3 + $0x8] sm:$0xff]
        %v251 = vperm.slane %v248, 0
        %v252 = vmul.f32 %v249, %v251
        %v253 = vmul.f32 %v250, %v251
        %v254 = vsel %vm236, %v252, 0.0
        %255 = vadd.xlane.f32.xlu0 %v254
        %v256 = vpop.xlane.xlu0 %255
        %v257 = vsel %vm236, %v253, 0.0
        %258 = vadd.xlane.f32.xlu0 %v257
        %v259 = vpop.xlane.xlu0 %258
        %v260 = vadd.f32 %v256, 3.0
        %v261 = vadd.f32 %v259, 3.0
        %v262 = vmax.f32 %v260, 0.0
        %v263 = vmax.f32 %v261, 0.0
        %v264 = vmin.f32 %v262, 6.0
        %v265 = vmin.f32 %v263, 6.0
        %v266 = vmul.f32 %v264, 0.16666667
        %v267 = vmul.f32 %v265, 0.16666667
        %v268 = vmul.f32 %v218, %v266
        %v269 = vmul.f32 %v219, %v266
        %v270 = vmul.f32 %v220, %v267
        %v271 = vmul.f32 %v221, %v267
        %272 = vst [vmem:[%s217] sm:$0xff] %v268
        %273 = vst [vmem:[%s217 + $0x8] sm:$0xff] %v269
        %274 = vst [vmem:[%s217 + $0x10] sm:$0xff] %v270
        %275 = vst [vmem:[%s217 + $0x18] sm:$0xff] %v271
        %s276 = sand.u32 %s118, 1
        %s277 = scalar_lea.sflag [#allocation4], %s276
        %s278 = sand.u32 %s118, 1
        %s279 = smul.addr %s278, 32
        %s280 = scalar_lea.vmem [#allocation5], %s279
        // Predicated region
        $region41: #{tpu_custom_call.1} parent=35 // pred_check
          %p281 = pneg %p128
        $region42: #{tpu_custom_call.1} parent=35 // pred_check_branch
          %283 = sbr.rel (%p281) target = $region44
        $region43: #{tpu_custom_call.1} parent=35 // pred_region
          %285 = vsyncadd %s277, 0
          %s286 = smul.addr %s21, 4
          %s287 = smul.addr %s286, 8
          %s288 = scalar_lea.hbm %s4, %s287
          %s289 = sshll.u32 %s280, 4
          %s290 = int_to_ptr.vmem [resolvable:$true] %s289
          %s291 = sshll.u32 %s288, 4
          %s292 = int_to_ptr.hbm [resolvable:$true] %s291
          %297 = dma.vmem_to_hbm [thread:$0]  %s290, 512, %s292, %s277, 256, 256, 16
        $region44: #{tpu_custom_call.1} parent=35 // pred_fallthru
          _
      $region36: #{tpu_custom_call.1} parent=5 // pred_fallthru
        _
      %p298 = scmp.le.s32.totalorder 2, %s16
      // Predicated region
      $region45: #{tpu_custom_call.1} parent=5 // pred_check
        %p299 = pneg %p298
      $region46: #{tpu_custom_call.1} parent=5 // pred_check_branch
        %301 = sbr.rel (%p299) target = $region48
      $region47: #{tpu_custom_call.1} parent=5 // pred_region
        %s302 = ssub.s32 %s16, 2
        // Predicated region
        $region49: #{tpu_custom_call.1} parent=47 // pred_check
          %p303 = pneg %p134
        $region50: #{tpu_custom_call.1} parent=47 // pred_check_branch
          %305 = sbr.rel (%p303) target = $region52
        $region51: #{tpu_custom_call.1} parent=47 // pred_region
          %s306 = sand.u32 %s119, 1
          %s307 = scalar_lea.sflag [#allocation4], %s306
          %s308 = sand.u32 %s119, 1
          %s309 = smul.addr %s308, 32
          %s310 = scalar_lea.vmem [#allocation5], %s309
          %312 = dma.done %s307, 512
        $region52: #{tpu_custom_call.1} parent=47 // pred_fallthru
          _
      $region48: #{tpu_custom_call.1} parent=5 // pred_fallthru
        _
    $region6: #{tpu_custom_call.1} parent=1 // loop_footer
      %s20 = sadd.s32 1, %s16
    $region7: #{tpu_custom_call.1} parent=1 // loop_footer_branch
      %15 = sbr.rel target = $region3
    $region8: #{tpu_custom_call.1} parent=1 // loop_exit
      _
    %313 = vsyncpa [#allocation3], 1
    %s314 = scalar_lea.sflag [#allocation3], 1
    %315 = vsyncpa %s314, 1
    %316 = vsyncpa [#allocation4], 1
    %s317 = scalar_lea.sflag [#allocation4], 1
    %318 = vsyncpa %s317, 1

</llo_original>
